<compile_context>
chip_gen: v5e
topology: v5e:2x2
jax: 0.10.0
libtpu: 0.0.40
codegen_flags: <defaults>
</compile_context>

<pallas_src>
import functools

import jax
import jax.numpy as jnp
from jax.experimental import pallas as pl
from jax.experimental.pallas import tpu as pltpu


def _round_up(x, m):
    return ((x + m - 1) // m) * m


def ngram_kernel(idx_ref, t_ref, b1_ref, w2_ref, b2_ref, o_ref, *, vocab_size):
    # idx_ref: (TM, C) int32 token ids for this batch tile
    # t_ref  : (cv_pad, hidden)   prefused emb@w1 table (rows >= C*V are zero)
    # b1_ref : (1, hidden) f32
    # w2_ref : (hidden, vocab_pad)
    # b2_ref : (1, vocab_pad) f32, padded lanes pre-set to -1e30 (mask baked in)
    # o_ref  : (TM, vocab_pad) f32 log-probs (padded lanes junk, sliced outside)
    tm, context_size = idx_ref.shape
    cv_pad = t_ref.shape[0]

    idx = idx_ref[...]                                                   # (TM, C)
    iota = jax.lax.broadcasted_iota(jnp.int32, (tm, cv_pad), 1)          # (TM, cv_pad)

    # Combined one-hot over all context positions: column c*V + idx[:, c] is 1.
    # 0/1 values are exact in bf16, so the selection matmul below is exact.
    sel = (iota == idx[:, 0:1]).astype(t_ref.dtype)
    for c in range(1, context_size):                                     # static, small
        sel = sel + (iota == (idx[:, c:c + 1] + c * vocab_size)).astype(t_ref.dtype)

    # Single MXU op for embedding gather + linear1 (128-deep contraction).
    acc = jnp.dot(sel, t_ref[...], preferred_element_type=jnp.float32)   # (TM, H) f32
    h = jnp.maximum(acc + b1_ref[...], 0.0)                              # ReLU, f32

    logits = jnp.dot(h.astype(w2_ref.dtype), w2_ref[...],
                     preferred_element_type=jnp.float32) + b2_ref[...]   # (TM, Vpad) f32

    # Padded lanes carry -1e30 from b2 -> exp underflows to 0, lse is exact over
    # the real vocab; no in-kernel masking needed.
    m = jnp.max(logits, axis=-1, keepdims=True)
    shifted = logits - m
    lse = jnp.log(jnp.sum(jnp.exp(shifted), axis=-1, keepdims=True))
    o_ref[...] = shifted - lse


def prepare_params(emb_table, w1, b1, w2, b2, *, compute_dtype=jnp.bfloat16):
    """One-time prep: fuse emb@w1 into a stacked table, pad to lane-dense widths,
    bake the vocab-pad mask into b2, cast matmul operands to compute_dtype."""
    vocab_size, emb_dim = emb_table.shape
    hidden = w1.shape[1]
    context_size = w1.shape[0] // emb_dim

    # T[c*V + v, :] = emb_table[v] @ w1[c*E:(c+1)*E, :]
    w1_r = w1.reshape(context_size, emb_dim, hidden)
    table = jnp.einsum("ve,ceh->cvh", emb_table, w1_r,
                       precision=jax.lax.Precision.HIGHEST)
    table = table.reshape(context_size * vocab_size, hidden)

    cv_pad = _round_up(context_size * vocab_size, 128)
    table_pad = (jnp.zeros((cv_pad, hidden), jnp.float32)
                 .at[:context_size * vocab_size].set(table)
                 .astype(compute_dtype))

    vocab_pad = _round_up(vocab_size, 128)
    w2_pad = (jnp.zeros((hidden, vocab_pad), jnp.float32)
              .at[:, :vocab_size].set(w2)
              .astype(compute_dtype))
    # Mask baked into the bias: padded logits come out as -1e30 (f32).
    b2_pad = jnp.full((1, vocab_pad), -1e30, jnp.float32).at[0, :vocab_size].set(b2)
    b1_2d = b1.reshape(1, hidden).astype(jnp.float32)

    return dict(table=table_pad, b1=b1_2d, w2=w2_pad, b2=b2_pad,
                vocab_size=vocab_size, context_size=context_size)


def _choose_tile(B):
    """Return (padded batch, tile rows)."""
    if B <= 16:
        tm = _round_up(max(B, 1), 8)
        return tm, tm                      # one tile; splitting only adds overhead
    if B <= 512:
        tm = _round_up((B + 1) // 2, 8)    # >=2 grid steps -> both v7x TCs run
        return 2 * tm, tm
    tm = 256                               # amortize per-step pipeline overhead
    return _round_up(B, tm), tm


def ngram_forward_batch(idx, params):
    """idx: int [B, context_size] token ids -> [B, vocab_size] f32 log-probs."""
    table, b1, w2, b2 = params["table"], params["b1"], params["w2"], params["b2"]
    vocab_size = params["vocab_size"]
    context_size = params["context_size"]

    B = idx.shape[0]
    cv_pad, hidden = table.shape
    vocab_pad = w2.shape[1]

    Bp, TM = _choose_tile(B)
    idx_p = jnp.zeros((Bp, context_size), jnp.int32).at[:B].set(idx.astype(jnp.int32))

    kernel = functools.partial(ngram_kernel, vocab_size=vocab_size)

    out = pl.pallas_call(
        kernel,
        out_shape=jax.ShapeDtypeStruct((Bp, vocab_pad), jnp.float32),
        grid=(Bp // TM,),
        in_specs=[
            pl.BlockSpec((TM, context_size), lambda i: (i, 0)),
            pl.BlockSpec((cv_pad, hidden), lambda i: (0, 0)),
            pl.BlockSpec((1, hidden), lambda i: (0, 0)),
            pl.BlockSpec((hidden, vocab_pad), lambda i: (0, 0)),
            pl.BlockSpec((1, vocab_pad), lambda i: (0, 0)),
        ],
        out_specs=pl.BlockSpec((TM, vocab_pad), lambda i: (i, 0)),
        compiler_params=pltpu.CompilerParams(
            dimension_semantics=("parallel",)),
    )(idx_p, table, b1, w2, b2)

    return out[:B, :vocab_size]


def ngram_forward(x_idx, params):
    """Module-equivalent forward: x_idx int [context_size] -> [1, vocab_size]."""
    return ngram_forward_batch(x_idx.reshape(1, -1), params)


def reference_forward_batch(idx, emb_table, w1, b1, w2, b2):
    B = idx.shape[0]
    emb = emb_table[idx].reshape(B, -1)
    h = jnp.maximum(jnp.dot(emb, w1, precision=jax.lax.Precision.HIGHEST) + b1, 0.0)
    logits = jnp.dot(h, w2, precision=jax.lax.Precision.HIGHEST) + b2
    return jax.nn.log_softmax(logits, axis=-1)


if __name__ == "__main__":
    vocab_size = 32
    context_size = 2
    emb_dim = 16
    hidden = 128

    key = jax.random.PRNGKey(0)
    k_emb, k_w1, k_b1, k_w2, k_b2, k_x, k_xb = jax.random.split(key, 7)

    emb_table = jax.random.normal(k_emb, (vocab_size, emb_dim), jnp.float32)
    w1 = jax.random.normal(k_w1, (context_size * emb_dim, hidden), jnp.float32) * 0.1
    b1 = jax.random.normal(k_b1, (hidden,), jnp.float32) * 0.1
    w2 = jax.random.normal(k_w2, (hidden, vocab_size), jnp.float32) * 0.1
    b2 = jax.random.normal(k_b2, (vocab_size,), jnp.float32) * 0.1

    x = jax.random.randint(k_x, (context_size,), 0, vocab_size, jnp.int32)
    xb = jax.random.randint(k_xb, (64, context_size), 0, vocab_size, jnp.int32)

    ref = reference_forward_batch(x.reshape(1, -1), emb_table, w1, b1, w2, b2)
    ref_b = reference_forward_batch(xb, emb_table, w1, b1, w2, b2)

    # --- Exact-semantics check: f32 compute path ---
    params_f32 = prepare_params(emb_table, w1, b1, w2, b2, compute_dtype=jnp.float32)

    out = ngram_forward(x, params_f32)                    # module-equivalent (B=1)
    jax.block_until_ready(out)
    assert out.shape == (1, vocab_size)
    assert jnp.allclose(out, ref, atol=2e-4, rtol=2e-4), "mismatch vs reference (f32, B=1)"

    out_b = ngram_forward_batch(xb, params_f32)           # batched, same kernel
    jax.block_until_ready(out_b)
    assert out_b.shape == (64, vocab_size)
    assert jnp.allclose(out_b, ref_b, atol=2e-4, rtol=2e-4), "mismatch vs reference (f32, B=64)"

    # --- Fast path: bf16 matmul operands, f32 accumulation / log_softmax ---
    params_bf16 = prepare_params(emb_table, w1, b1, w2, b2, compute_dtype=jnp.bfloat16)
    out_fast = ngram_forward_batch(xb, params_bf16)
    jax.block_until_ready(out_fast)
    assert out_fast.shape == (64, vocab_size)
    assert jnp.allclose(out_fast, ref_b, atol=5e-2, rtol=5e-2), "mismatch vs reference (bf16)"

    print("KERNEL_OK")
</pallas_src>

<mosaic_0001>
module attributes {stable_mosaic.version = 11 : i64} {
  func.func @ngram_kernel(%arg0: i32, %arg1: memref<8x2xi32, #tpu.memory_space<vmem>>, %arg2: memref<128x128xf32, #tpu.memory_space<vmem>>, %arg3: memref<1x128xf32, #tpu.memory_space<vmem>>, %arg4: memref<128x128xf32, #tpu.memory_space<vmem>>, %arg5: memref<1x128xf32, #tpu.memory_space<vmem>>, %arg6: memref<8x128xf32, #tpu.memory_space<vmem>>) attributes {dimension_semantics = [#tpu.dimension_semantics<parallel>], iteration_bounds = array<i64: 1>, scalar_prefetch = 0 : i64, scratch_operands = 0 : i64, tpu.core_type = #tpu.core_type<tc>, window_params = [{transform_indices = @transform_0, window_bounds = array<i64: 8, 2>}, {pipeline_mode = #tpu.pipeline_mode<synchronous>, transform_indices = @transform_1, window_bounds = array<i64: 128, 128>}, {pipeline_mode = #tpu.pipeline_mode<synchronous>, transform_indices = @transform_2, window_bounds = array<i64: 1, 128>}, {pipeline_mode = #tpu.pipeline_mode<synchronous>, transform_indices = @transform_3, window_bounds = array<i64: 128, 128>}, {pipeline_mode = #tpu.pipeline_mode<synchronous>, transform_indices = @transform_4, window_bounds = array<i64: 1, 128>}, {transform_indices = @transform_5, window_bounds = array<i64: 8, 128>}]} {
    %c0 = arith.constant 0 : index
    %c0_0 = arith.constant 0 : index
    %0 = vector.load %arg1[%c0, %c0_0] : memref<8x2xi32, #tpu.memory_space<vmem>>, vector<8x2xi32>
    %1 = tpu.iota {dimensions = array<i32: 1>} : vector<8x128xi32>
    %2 = vector.extract_strided_slice %0 {offsets = [0, 0], sizes = [8, 1], strides = [1, 1]} : vector<8x2xi32> to vector<8x1xi32>
    %3 = vector.broadcast %2 : vector<8x1xi32> to vector<8x128xi32>
    %4 = arith.cmpi eq, %1, %3 : vector<8x128xi32>
    %5 = arith.extui %4 : vector<8x128xi1> to vector<8x128xi32>
    %6 = arith.sitofp %5 : vector<8x128xi32> to vector<8x128xf32>
    %7 = vector.extract_strided_slice %0 {offsets = [0, 1], sizes = [8, 1], strides = [1, 1]} : vector<8x2xi32> to vector<8x1xi32>
    %c32_i32 = arith.constant 32 : i32
    %8 = vector.broadcast %c32_i32 : i32 to vector<8x1xi32>
    %9 = arith.addi %7, %8 : vector<8x1xi32>
    %10 = vector.broadcast %9 : vector<8x1xi32> to vector<8x128xi32>
    %11 = arith.cmpi eq, %1, %10 : vector<8x128xi32>
    %12 = arith.extui %11 : vector<8x128xi1> to vector<8x128xi32>
    %13 = arith.sitofp %12 : vector<8x128xi32> to vector<8x128xf32>
    %14 = arith.addf %6, %13 : vector<8x128xf32>
    %c0_1 = arith.constant 0 : index
    %c0_2 = arith.constant 0 : index
    %15 = vector.load %arg2[%c0_1, %c0_2] : memref<128x128xf32, #tpu.memory_space<vmem>>, vector<128x128xf32>
    %cst = arith.constant dense<0.000000e+00> : vector<8x128xf32>
    %16 = tpu.matmul %14, %15, %cst {dimension_numbers = #tpu.dot_dimension_numbers<[1], [0], [0], [1], [0, 0, 1, 1], [], []>} : vector<8x128xf32>, vector<128x128xf32>, vector<8x128xf32> -> vector<8x128xf32>
    %c0_3 = arith.constant 0 : index
    %c0_4 = arith.constant 0 : index
    %17 = vector.load %arg3[%c0_3, %c0_4] : memref<1x128xf32, #tpu.memory_space<vmem>>, vector<1x128xf32>
    %18 = vector.broadcast %17 : vector<1x128xf32> to vector<8x128xf32>
    %19 = arith.addf %16, %18 : vector<8x128xf32>
    %cst_5 = arith.constant 0.000000e+00 : f32
    %20 = vector.broadcast %cst_5 : f32 to vector<8x128xf32>
    %21 = arith.maximumf %19, %20 : vector<8x128xf32>
    %c0_6 = arith.constant 0 : index
    %c0_7 = arith.constant 0 : index
    %22 = vector.load %arg4[%c0_6, %c0_7] : memref<128x128xf32, #tpu.memory_space<vmem>>, vector<128x128xf32>
    %cst_8 = arith.constant dense<0.000000e+00> : vector<8x128xf32>
    %23 = tpu.matmul %21, %22, %cst_8 {dimension_numbers = #tpu.dot_dimension_numbers<[1], [0], [0], [1], [0, 0, 1, 1], [], []>} : vector<8x128xf32>, vector<128x128xf32>, vector<8x128xf32> -> vector<8x128xf32>
    %c0_9 = arith.constant 0 : index
    %c0_10 = arith.constant 0 : index
    %24 = vector.load %arg5[%c0_9, %c0_10] : memref<1x128xf32, #tpu.memory_space<vmem>>, vector<1x128xf32>
    %25 = vector.broadcast %24 : vector<1x128xf32> to vector<8x128xf32>
    %26 = arith.addf %23, %25 : vector<8x128xf32>
    %cst_11 = arith.constant dense<0xFF800000> : vector<8xf32>
    %27 = vector.multi_reduction <maximumf>, %26, %cst_11 [1] : vector<8x128xf32> to vector<8xf32>
    %28 = vector.shape_cast %27 : vector<8xf32> to vector<8x1xf32>
    %29 = vector.broadcast %28 : vector<8x1xf32> to vector<8x128xf32>
    %30 = arith.subf %26, %29 : vector<8x128xf32>
    %31 = math.exp %30 : vector<8x128xf32>
    %cst_12 = arith.constant dense<0.000000e+00> : vector<8xf32>
    %32 = vector.multi_reduction <add>, %31, %cst_12 [1] : vector<8x128xf32> to vector<8xf32>
    %33 = vector.shape_cast %32 : vector<8xf32> to vector<8x1xf32>
    %34 = math.log %33 : vector<8x1xf32>
    %35 = vector.broadcast %34 : vector<8x1xf32> to vector<8x128xf32>
    %36 = arith.subf %30, %35 : vector<8x128xf32>
    %c0_13 = arith.constant 0 : index
    %c0_14 = arith.constant 0 : index
    %37 = vector.load %arg6[%c0_13, %c0_14] : memref<8x128xf32, #tpu.memory_space<vmem>>, vector<8x128xf32>
    tpu.vector_store %arg6[%c0_13, %c0_14], %36 {strides = array<i32>} : memref<8x128xf32, #tpu.memory_space<vmem>>, vector<8x128xf32>,
    return
  }
  func.func @transform_0(%arg0: i32) -> (i32, i32) {
    %c0_i32 = arith.constant 0 : i32
    %c0_i32_0 = arith.constant 0 : i32
    return %arg0, %c0_i32 : i32, i32
  }
  func.func @transform_1(%arg0: i32) -> (i32, i32) {
    %c0_i32 = arith.constant 0 : i32
    %c0_i32_0 = arith.constant 0 : i32
    %c0_i32_1 = arith.constant 0 : i32
    return %c0_i32, %c0_i32_0 : i32, i32
  }
  func.func @transform_2(%arg0: i32) -> (i32, i32) {
    %c0_i32 = arith.constant 0 : i32
    %c0_i32_0 = arith.constant 0 : i32
    %c0_i32_1 = arith.constant 0 : i32
    return %c0_i32, %c0_i32_0 : i32, i32
  }
  func.func @transform_3(%arg0: i32) -> (i32, i32) {
    %c0_i32 = arith.constant 0 : i32
    %c0_i32_0 = arith.constant 0 : i32
    %c0_i32_1 = arith.constant 0 : i32
    return %c0_i32, %c0_i32_0 : i32, i32
  }
  func.func @transform_4(%arg0: i32) -> (i32, i32) {
    %c0_i32 = arith.constant 0 : i32
    %c0_i32_0 = arith.constant 0 : i32
    %c0_i32_1 = arith.constant 0 : i32
    return %c0_i32, %c0_i32_0 : i32, i32
  }
  func.func @transform_5(%arg0: i32) -> (i32, i32) {
    %c0_i32 = arith.constant 0 : i32
    %c0_i32_0 = arith.constant 0 : i32
    return %arg0, %c0_i32 : i32, i32
  }
}

</mosaic_0001>

<llo_original>
// kernel: tpu_custom_call.1
$region0: #{tpu_custom_call.1}
  #allocation0 [shape = 'u32[]', space=smem, size = 0x4, offset = 0x4, fixed_abs, tag = 'smem constant byte address 0x4 - core index']
  #allocation1 [shape = 'u32[72,128]{1,0:T(1,128)}', space=vmem, size = 0x9000, scoped, tag = 'internal scratch']
  %s0 = inlined_call_operand.vmem [shape: s32[8,2], index: 0, kind: input, shape index: {}]
  %s1 = inlined_call_operand.hbm [shape: f32[128,128], index: 1, kind: input, shape index: {}]
  %s2 = inlined_call_operand.vmem [shape: f32[1,128], index: 2, kind: input, shape index: {}]
  %s3 = inlined_call_operand.hbm [shape: f32[128,128], index: 3, kind: input, shape index: {}]
  %s4 = inlined_call_operand.vmem [shape: f32[1,128], index: 4, kind: input, shape index: {}]
  %s5 = inlined_call_operand.hbm [shape: f32[8,128], index: 5, kind: output, shape index: {}]
  %s6 = sld [smem:[#allocation0]]
  $region38: #{tpu_custom_call.1} parent=0
    _
  %s8 = ssub.s32 1, %s6
  %s9 = scalar_select 0, %s8, %s6
  $region1: #{tpu_custom_call.1} parent=0
    #allocation2 [shape = 'u8[65536]{0}', space=vmem, size = 0x10000, scoped, tag = 'input window, operand 1, single buffered']
    #allocation3 [shape = 's32[1]{0}', space=sflag, size = 0x4, scoped, tag = 'scoped memory for tpu_custom_call.1']
    #allocation4 [shape = 's32[1]{0}', space=sflag, size = 0x4, scoped, tag = 'scoped memory for tpu_custom_call.1']
    #allocation5 [shape = 'u8[65536]{0}', space=vmem, size = 0x10000, scoped, tag = 'input window, operand 3, single buffered']
    #allocation6 [shape = 's32[1]{0}', space=sflag, size = 0x4, scoped, tag = 'scoped memory for tpu_custom_call.1']
    #allocation7 [shape = 'u8[4096]{0}', space=vmem, size = 0x1000, scoped, tag = 'output window, operand 0, single buffered']
    %10 = vsyncpa [#allocation3], 0
    %11 = vsyncpa [#allocation6], 0
    %12 = vsyncpa [#allocation4], 0
    // Predicated region
    $region2: #{tpu_custom_call.1} parent=1 // pred_check
      _
    $region3: #{tpu_custom_call.1} parent=1 // pred_check_branch
      %14 = sbr.rel (0) target = $region5
    $region4: #{tpu_custom_call.1} parent=1 // pred_region
      _
    $region5: #{tpu_custom_call.1} parent=1 // pred_fallthru
      _
    // Predicated region
    $region6: #{tpu_custom_call.1} parent=1 // pred_check
      _
    $region7: #{tpu_custom_call.1} parent=1 // pred_check_branch
      %16 = sbr.rel (0) target = $region9
    $region8: #{tpu_custom_call.1} parent=1 // pred_region
      %18 = vsyncadd [#allocation3], 0
      %s19 = sshll.u32 %s1, 4
      %s20 = int_to_ptr.hbm [resolvable:$true] %s19
      %s21 = sshll.u32 [#allocation2], 4
      %s22 = int_to_ptr.vmem [resolvable:$true] %s21
      %27 = dma.hbm_to_vmem [thread:$0]  %s20, 2048, %s22, [#allocation3], 128, 128, 8
    $region9: #{tpu_custom_call.1} parent=1 // pred_fallthru
      _
    // Predicated region
    $region10: #{tpu_custom_call.1} parent=1 // pred_check
      _
    $region11: #{tpu_custom_call.1} parent=1 // pred_check_branch
      %29 = sbr.rel (0) target = $region13
    $region12: #{tpu_custom_call.1} parent=1 // pred_region
      _
    $region13: #{tpu_custom_call.1} parent=1 // pred_fallthru
      _
    // Predicated region
    $region14: #{tpu_custom_call.1} parent=1 // pred_check
      _
    $region15: #{tpu_custom_call.1} parent=1 // pred_check_branch
      %31 = sbr.rel (0) target = $region17
    $region16: #{tpu_custom_call.1} parent=1 // pred_region
      %33 = vsyncadd [#allocation6], 0
      %s34 = sshll.u32 %s3, 4
      %s35 = int_to_ptr.hbm [resolvable:$true] %s34
      %s36 = sshll.u32 [#allocation5], 4
      %s37 = int_to_ptr.vmem [resolvable:$true] %s36
      %42 = dma.hbm_to_vmem [thread:$0]  %s35, 2048, %s37, [#allocation6], 128, 128, 8
    $region17: #{tpu_custom_call.1} parent=1 // pred_fallthru
      _
    // Predicated region
    $region18: #{tpu_custom_call.1} parent=1 // pred_check
      _
    $region19: #{tpu_custom_call.1} parent=1 // pred_check_branch
      %44 = sbr.rel (0) target = $region21
    $region20: #{tpu_custom_call.1} parent=1 // pred_region
      _
    $region21: #{tpu_custom_call.1} parent=1 // pred_fallthru
      _
    // Predicated region
    $region22: #{tpu_custom_call.1} parent=1 // pred_check
      _
    $region23: #{tpu_custom_call.1} parent=1 // pred_check_branch
      %46 = sbr.rel (0) target = $region25
    $region24: #{tpu_custom_call.1} parent=1 // pred_region
      %48 = dma.done [#allocation3], 2048
    $region25: #{tpu_custom_call.1} parent=1 // pred_fallthru
      _
    // Predicated region
    $region26: #{tpu_custom_call.1} parent=1 // pred_check
      _
    $region27: #{tpu_custom_call.1} parent=1 // pred_check_branch
      %50 = sbr.rel (0) target = $region29
    $region28: #{tpu_custom_call.1} parent=1 // pred_region
      %52 = dma.done [#allocation6], 2048
    $region29: #{tpu_custom_call.1} parent=1 // pred_fallthru
      _
    %v53 = vld [vmem:[%s0] sm:$0xff]
    %v54 = vlaneseq
    %v55 = vand.u32 %v54, 127
    %56 = vset.pattern.permute.xlu0 0
    %57 = vperm.xlu0 %56, %v53
    %v58 = vpop.permute.xlu0 %57
    %vm59 = vcmp.eq.s32.totalorder %v55, %v58
    %v60 = vsel %vm59, 1, 0
    %v61 = vcvt.s32.f32 %v60
    %v62 = vadd.s32 %v53, 32
    %63 = vset.pattern.permute.xlu0 1
    %64 = vperm.xlu0 %63, %v62
    %v65 = vpop.permute.xlu0 %64
    %vm66 = vcmp.eq.s32.totalorder %v55, %v65
    %v67 = vsel %vm66, 1, 0
    %v68 = vcvt.s32.f32 %v67
    %v69 = vadd.f32 %v61, %v68
    %v70 = vld [vmem:[#allocation2] sm:$0xff]
    %v71 = vld [vmem:[#allocation2 + $0x8] sm:$0xff]
    %v72 = vld [vmem:[#allocation2 + $0x10] sm:$0xff]
    %v73 = vld [vmem:[#allocation2 + $0x18] sm:$0xff]
    %v74 = vld [vmem:[#allocation2 + $0x20] sm:$0xff]
    %v75 = vld [vmem:[#allocation2 + $0x28] sm:$0xff]
    %v76 = vld [vmem:[#allocation2 + $0x30] sm:$0xff]
    %v77 = vld [vmem:[#allocation2 + $0x38] sm:$0xff]
    %v78 = vld [vmem:[#allocation2 + $0x40] sm:$0xff]
    %v79 = vld [vmem:[#allocation2 + $0x48] sm:$0xff]
    %v80 = vld [vmem:[#allocation2 + $0x50] sm:$0xff]
    %v81 = vld [vmem:[#allocation2 + $0x58] sm:$0xff]
    %v82 = vld [vmem:[#allocation2 + $0x60] sm:$0xff]
    %v83 = vld [vmem:[#allocation2 + $0x68] sm:$0xff]
    %v84 = vld [vmem:[#allocation2 + $0x70] sm:$0xff]
    %v85 = vld [vmem:[#allocation2 + $0x78] sm:$0xff]
    %v86 = vld [vmem:[%s2] sm:$0x1]
    %v88 = vperm.slane %v86, 0
    %90 = vmatpush.msra.mxu0 %v85
    %91 = vmatpush.msra.mxu0 %v84
    %92 = vmatpush.msra.mxu0 %v83
    %93 = vmatpush.msra.mxu0 %v82
    %94 = vmatpush.msra.mxu0 %v81
    %95 = vmatpush.msra.mxu0 %v80
    %96 = vmatpush.msra.mxu0 %v79
    %97 = vmatpush.msra.mxu0 %v78
    %98 = vmatpush.msra.mxu0 %v77
    %99 = vmatpush.msra.mxu0 %v76
    %100 = vmatpush.msra.mxu0 %v75
    %101 = vmatpush.msra.mxu0 %v74
    %102 = vmatpush.msra.mxu0 %v73
    %103 = vmatpush.msra.mxu0 %v72
    %104 = vmatpush.msra.mxu0 %v71
    %105 = vmatpush.msra.mxu0 %v70
    %106 = vmatmul.f32.gmra.mxu0 %v69
    %v107 = vpop.f32.mrf.mxu0
    %v108 = vadd.f32 %v88, %v107
    %109 = vdwg.mxu0
    %v110 = vmax.f32 %v108, 0.0
    %v111 = vld [vmem:[#allocation5] sm:$0xff]
    %v112 = vld [vmem:[#allocation5 + $0x8] sm:$0xff]
    %v113 = vld [vmem:[#allocation5 + $0x10] sm:$0xff]
    %v114 = vld [vmem:[#allocation5 + $0x18] sm:$0xff]
    %v115 = vld [vmem:[#allocation5 + $0x20] sm:$0xff]
    %v116 = vld [vmem:[#allocation5 + $0x28] sm:$0xff]
    %v117 = vld [vmem:[#allocation5 + $0x30] sm:$0xff]
    %v118 = vld [vmem:[#allocation5 + $0x38] sm:$0xff]
    %v119 = vld [vmem:[#allocation5 + $0x40] sm:$0xff]
    %v120 = vld [vmem:[#allocation5 + $0x48] sm:$0xff]
    %v121 = vld [vmem:[#allocation5 + $0x50] sm:$0xff]
    %v122 = vld [vmem:[#allocation5 + $0x58] sm:$0xff]
    %v123 = vld [vmem:[#allocation5 + $0x60] sm:$0xff]
    %v124 = vld [vmem:[#allocation5 + $0x68] sm:$0xff]
    %v125 = vld [vmem:[#allocation5 + $0x70] sm:$0xff]
    %v126 = vld [vmem:[#allocation5 + $0x78] sm:$0xff]
    %v127 = vld [vmem:[%s4] sm:$0x1]
    %v129 = vperm.slane %v127, 0
    %131 = vmatpush.msra.mxu0 %v126
    %132 = vmatpush.msra.mxu0 %v125
    %133 = vmatpush.msra.mxu0 %v124
    %134 = vmatpush.msra.mxu0 %v123
    %135 = vmatpush.msra.mxu0 %v122
    %136 = vmatpush.msra.mxu0 %v121
    %137 = vmatpush.msra.mxu0 %v120
    %138 = vmatpush.msra.mxu0 %v119
    %139 = vmatpush.msra.mxu0 %v118
    %140 = vmatpush.msra.mxu0 %v117
    %141 = vmatpush.msra.mxu0 %v116
    %142 = vmatpush.msra.mxu0 %v115
    %143 = vmatpush.msra.mxu0 %v114
    %144 = vmatpush.msra.mxu0 %v113
    %145 = vmatpush.msra.mxu0 %v112
    %146 = vmatpush.msra.mxu0 %v111
    %147 = vmatmul.f32.gmra.mxu0 %v110
    %v148 = vpop.f32.mrf.mxu0
    %v149 = vadd.f32 %v129, %v148
    %150 = vdwg.mxu0
    %151 = vmax.xlane.f32.xlu0 %v149
    %v152 = vpop.xlane.xlu0 %151
    %v153 = vsub.f32 %v149, %v152
    %v154 = vmul.f32 %v153, 1.442695
    %v155 = vpow.pop %v154
    %156 = vadd.xlane.f32.xlu0 %v155
    %v157 = vpop.xlane.xlu0 %156
    %v158 = vlog2.pop %v157
    %v159 = vmul.f32 %v158, 0.6931472
    %v160 = vsub.f32 %v153, %v159
    %161 = vst [vmem:[#allocation7] sm:$0xff] %v160
    // Predicated region
    $region30: #{tpu_custom_call.1} parent=1 // pred_check
      _
    $region31: #{tpu_custom_call.1} parent=1 // pred_check_branch
      %163 = sbr.rel (0) target = $region33
    $region32: #{tpu_custom_call.1} parent=1 // pred_region
      %165 = vsyncadd [#allocation4], 0
      %s167 = sshll.u32 [#allocation7], 4
      %s168 = int_to_ptr.vmem [resolvable:$true] %s167
      %s169 = sshll.u32 %s5, 4
      %s170 = int_to_ptr.hbm [resolvable:$true] %s169
      %172 = dma.vmem_to_hbm [thread:$0]  %s168, 128, %s170, [#allocation4]
    $region33: #{tpu_custom_call.1} parent=1 // pred_fallthru
      _
    // Predicated region
    $region34: #{tpu_custom_call.1} parent=1 // pred_check
      _
    $region35: #{tpu_custom_call.1} parent=1 // pred_check_branch
      %174 = sbr.rel (0) target = $region37
    $region36: #{tpu_custom_call.1} parent=1 // pred_region
      %176 = dma.done [#allocation4], 128
    $region37: #{tpu_custom_call.1} parent=1 // pred_fallthru
      _
    %177 = vsyncpa [#allocation3], 1
    %178 = vsyncpa [#allocation6], 1
    %179 = vsyncpa [#allocation4], 1

</llo_original>
